<compile_context>
chip_gen: v5e
topology: v5e:2x2
jax: 0.10.0
libtpu: 0.0.40
codegen_flags: <defaults>
</compile_context>

<pallas_src>
import functools

import jax
import jax.numpy as jnp
from jax import lax
from jax.experimental import pallas as pl
from jax.experimental.pallas import tpu as pltpu

_MAX_TILE_BYTES = 8 * 1024 * 1024     # 8 MiB tile; in+out double-buffered ~= 32 MiB VMEM
_VMEM_LIMIT_BYTES = 48 * 1024 * 1024  # headroom above the 32 MiB resident footprint


def _dropout_kernel(seed_ref, x_ref, o_ref, *, threshold, scale, use_hw_prng):
    if use_hw_prng:
        # One independent hardware-PRNG stream per grid step: deterministic given
        # (seed, tiling), independent of which TensorCore executes the step.
        pltpu.prng_seed(seed_ref[0], pl.program_id(0))
        bits = pltpu.prng_random_bits(x_ref.shape)
        if bits.dtype != jnp.uint32:
            bits = pltpu.bitcast(bits, jnp.uint32)
    else:
        # Interpret / non-TPU fallback: counter-based hash of the global element index.
        # Kept VPU-cheap: (tr,1) row iota + (1,tl) col iota, two-round finalizer.
        tr, tl = x_ref.shape
        row0 = pl.program_id(0) * tr
        r = (lax.broadcasted_iota(jnp.int32, (tr, 1), 0) + row0) * jnp.int32(tl)
        r = r + seed_ref[0] * jnp.int32(-1640531527)      # 0x9E3779B9 (wrapping)
        c = lax.broadcasted_iota(jnp.int32, (1, tl), 1)
        bits = (r + c).astype(jnp.uint32)
        bits = bits ^ (bits >> 16)
        bits = bits * jnp.uint32(0x7FEB352D)
        bits = bits ^ (bits >> 15)

    # Keep iff draw >= p * 2^32  (prob = 1 - p).  Scale applied in the native dtype,
    # matching PyTorch's fused dropout (sub-ulp scale rounding for bf16 is accepted).
    keep = bits >= jnp.uint32(threshold)
    o_ref[...] = jnp.where(keep, x_ref[...] * scale, 0).astype(o_ref.dtype)


def spatial_dropout1d(x, p, seed, training=True):
    """x: (N, C, L) array. Element-wise dropout; returns array of same shape/dtype."""
    if (not training) or p == 0.0:
        return x
    if p >= 1.0:
        return jnp.zeros_like(x)

    orig_shape = x.shape
    total = x.size
    itemsize = jnp.dtype(x.dtype).itemsize
    sub = 8 * (4 // itemsize)            # sublane packing: 8 f32, 16 bf16/f16, 32 int8

    # Lane-dense slab view with zero copies: widest power-of-two lane count dividing
    # the element count; otherwise fall back to (prod(leading dims), last dim).
    lanes = None
    for cand in (1024, 512, 256, 128):
        if total % cand == 0:
            lanes = cand
            break
    if lanes is None:
        lanes = orig_shape[-1]
    rows = total // lanes
    x2 = x.reshape(rows, lanes)

    # Rows per grid step: biggest tile <= _MAX_TILE_BYTES, rounded to the sublane pack.
    max_tile_rows = max(sub, (_MAX_TILE_BYTES // (lanes * itemsize)) // sub * sub)
    tile_rows = rows if rows <= max_tile_rows else max_tile_rows
    # v7x megacore: guarantee >=2 grid steps whenever the row axis is splittable.
    if rows > sub and pl.cdiv(rows, tile_rows) == 1:
        tile_rows = min(rows, (((rows + 1) // 2) + sub - 1) // sub * sub)
    grid = (pl.cdiv(rows, tile_rows),)

    seed_arr = jnp.asarray([seed], dtype=jnp.int32)
    threshold = min(int(round(p * (2 ** 32))), 2 ** 32 - 1)
    scale = 1.0 / (1.0 - p)
    use_hw_prng = jax.default_backend() == "tpu"

    kernel = functools.partial(
        _dropout_kernel, threshold=threshold, scale=scale, use_hw_prng=use_hw_prng
    )

    out2 = pl.pallas_call(
        kernel,
        out_shape=jax.ShapeDtypeStruct(x2.shape, x2.dtype),
        grid_spec=pltpu.PrefetchScalarGridSpec(
            num_scalar_prefetch=1,                 # seed lives in SMEM for every step
            grid=grid,
            in_specs=[pl.BlockSpec((tile_rows, lanes), lambda i, seed: (i, 0))],
            out_specs=pl.BlockSpec((tile_rows, lanes), lambda i, seed: (i, 0)),
        ),
        compiler_params=pltpu.CompilerParams(
            dimension_semantics=("parallel",),     # shard grid steps across TCs (v7x)
            vmem_limit_bytes=_VMEM_LIMIT_BYTES,
        ),
    )(seed_arr, x2)

    return out2.reshape(orig_shape)


if __name__ == "__main__":
    key = jax.random.PRNGKey(0)
    N, C, L = 2, 4, 16          # small (N, C, L) input, consistent with forward()
    p = 0.5
    x = jax.random.normal(key, (N, C, L), dtype=jnp.float32)

    # Training-mode dropout (stochastic, deterministic given the seed).
    y = jax.block_until_ready(spatial_dropout1d(x, p=p, seed=1234, training=True))

    # Sanity checks: shape/dtype preserved, surviving elements scaled by 1/(1-p).
    assert y.shape == x.shape and y.dtype == x.dtype
    kept = y != 0.0
    scale = 1.0 / (1.0 - p)
    assert jnp.allclose(jnp.where(kept, y, 0.0),
                        jnp.where(kept, x * scale, 0.0), rtol=1e-5, atol=1e-5)

    # Keep-rate is roughly 1-p (loose bound; deterministic given the seed).
    keep_frac = float(jnp.mean(kept.astype(jnp.float32)))
    assert 0.1 < keep_frac < 0.9

    # Eval-mode is identity.
    y_eval = jax.block_until_ready(spatial_dropout1d(x, p=p, seed=0, training=False))
    assert jnp.array_equal(y_eval, x)

    print("KERNEL_OK")
</pallas_src>

<mosaic_0001>
module attributes {stable_mosaic.version = 11 : i64} {
  func.func @_dropout_kernel(%arg0: i32, %arg1: memref<1xi32, #tpu.memory_space<smem>>, %arg2: memref<1x128xf32, #tpu.memory_space<vmem>>, %arg3: memref<1x128xf32, #tpu.memory_space<vmem>>) attributes {dimension_semantics = [#tpu.dimension_semantics<parallel>], iteration_bounds = array<i64: 1>, scalar_prefetch = 1 : i64, scratch_operands = 0 : i64, tpu.core_type = #tpu.core_type<tc>, window_params = [{transform_indices = @transform_0, window_bounds = array<i64: 1, 128>}, {transform_indices = @transform_1, window_bounds = array<i64: 1, 128>}]} {
    %c1_i32 = arith.constant 1 : i32
    %0 = arith.muli %arg0, %c1_i32 : i32
    %1 = tpu.iota {dimensions = array<i32: 0>} : vector<1x1xi32>
    %2 = vector.broadcast %0 : i32 to vector<1x1xi32>
    %3 = arith.addi %1, %2 : vector<1x1xi32>
    %c128_i32 = arith.constant 128 : i32
    %4 = vector.broadcast %c128_i32 : i32 to vector<1x1xi32>
    %5 = arith.muli %3, %4 : vector<1x1xi32>
    %c0 = arith.constant 0 : index
    %6 = memref.load %arg1[%c0] : memref<1xi32, #tpu.memory_space<smem>>
    %c-1640531527_i32 = arith.constant -1640531527 : i32
    %7 = arith.muli %6, %c-1640531527_i32 : i32
    %8 = vector.broadcast %7 : i32 to vector<1x1xi32>
    %9 = arith.addi %5, %8 : vector<1x1xi32>
    %10 = tpu.iota {dimensions = array<i32: 1>} : vector<1x128xi32>
    %11 = vector.broadcast %9 : vector<1x1xi32> to vector<1x128xi32>
    %12 = arith.addi %11, %10 : vector<1x128xi32>
    %c16_i32 = arith.constant 16 : i32
    %13 = vector.broadcast %c16_i32 : i32 to vector<1x128xi32>
    %14 = arith.shrui %12, %13 : vector<1x128xi32>
    %15 = arith.xori %12, %14 : vector<1x128xi32>
    %c2146121005_i32 = arith.constant 2146121005 : i32
    %16 = vector.broadcast %c2146121005_i32 : i32 to vector<1x128xi32>
    %17 = arith.muli %15, %16 : vector<1x128xi32>
    %c15_i32 = arith.constant 15 : i32
    %18 = vector.broadcast %c15_i32 : i32 to vector<1x128xi32>
    %19 = arith.shrui %17, %18 : vector<1x128xi32>
    %20 = arith.xori %17, %19 : vector<1x128xi32>
    %c-2147483648_i32 = arith.constant -2147483648 : i32
    %21 = vector.broadcast %c-2147483648_i32 : i32 to vector<1x128xi32>
    %22 = arith.cmpi uge, %20, %21 : vector<1x128xi32>
    %c0_0 = arith.constant 0 : index
    %c0_1 = arith.constant 0 : index
    %23 = vector.load %arg2[%c0_0, %c0_1] : memref<1x128xf32, #tpu.memory_space<vmem>>, vector<1x128xf32>
    %cst = arith.constant 2.000000e+00 : f32
    %24 = vector.broadcast %cst : f32 to vector<1x128xf32>
    %25 = arith.mulf %23, %24 : vector<1x128xf32>
    %c0_i32 = arith.constant 0 : i32
    %26 = arith.sitofp %c0_i32 : i32 to f32
    %27 = vector.broadcast %26 : f32 to vector<1x128xf32>
    %28 = arith.select %22, %25, %27 : vector<1x128xi1>, vector<1x128xf32>
    %c0_2 = arith.constant 0 : index
    %c0_3 = arith.constant 0 : index
    %29 = vector.load %arg3[%c0_2, %c0_3] : memref<1x128xf32, #tpu.memory_space<vmem>>, vector<1x128xf32>
    tpu.vector_store %arg3[%c0_2, %c0_3], %28 {strides = array<i32>} : memref<1x128xf32, #tpu.memory_space<vmem>>, vector<1x128xf32>,
    return
  }
  func.func @transform_0(%arg0: i32, %arg1: memref<1xi32, #tpu.memory_space<smem>>) -> (i32, i32) {
    %c0_i32 = arith.constant 0 : i32
    %c0_i32_0 = arith.constant 0 : i32
    return %arg0, %c0_i32 : i32, i32
  }
  func.func @transform_1(%arg0: i32, %arg1: memref<1xi32, #tpu.memory_space<smem>>) -> (i32, i32) {
    %c0_i32 = arith.constant 0 : i32
    %c0_i32_0 = arith.constant 0 : i32
    return %arg0, %c0_i32 : i32, i32
  }
}

</mosaic_0001>

<llo_original>
// kernel: tpu_custom_call.1
$region0: #{tpu_custom_call.1}
  #allocation0 [shape = 'u32[]', space=smem, size = 0x4, offset = 0x4, fixed_abs, tag = 'smem constant byte address 0x4 - core index']
  #allocation1 [shape = 'u32[72,128]{1,0:T(1,128)}', space=vmem, size = 0x9000, scoped, tag = 'internal scratch']
  #allocation2 [shape = 's32[1]{0}', space=sflag, size = 0x4, scoped, tag = 'scoped memory for tpu_custom_call.1']
  #allocation3 [shape = 's32[1]{0:T(128)S(6)}', space=smem, size = 0x200, scoped, tag = 'prefetched SMEM operand 0']
  %s0 = inlined_call_operand.<no memory space> [shape: s32[1], index: 0, kind: input, shape index: {}]
  %s1 = inlined_call_operand.vmem [shape: f32[1,128], index: 1, kind: input, shape index: {}]
  %s2 = inlined_call_operand.hbm [shape: f32[1,128], index: 2, kind: output, shape index: {}]
  %s3 = sld [smem:[#allocation0]]
  $region14: #{tpu_custom_call.1} parent=0
    _
  %s5 = ssub.s32 1, %s3
  %s6 = scalar_select 0, %s5, %s3
  %7 = sst [smem:[#allocation3]] %s0
  $region1: #{tpu_custom_call.1} parent=0
    #allocation4 [shape = 'u8[512]{0}', space=vmem, size = 0x400, scoped, tag = 'output window, operand 0, single buffered']
    #allocation5 [shape = 's32[1]{0}', space=sflag, size = 0x4, scoped, tag = 'scoped memory for tpu_custom_call.1']
    %8 = vsyncpa [#allocation5], 0
    // Predicated region
    $region2: #{tpu_custom_call.1} parent=1 // pred_check
      _
    $region3: #{tpu_custom_call.1} parent=1 // pred_check_branch
      %10 = sbr.rel (0) target = $region5
    $region4: #{tpu_custom_call.1} parent=1 // pred_region
      _
    $region5: #{tpu_custom_call.1} parent=1 // pred_fallthru
      _
    %v11 = vlaneseq
    %v12 = vshrl.u32 %v11, 7
    %v13 = vstv 0
    %v14 = vadd.s32 %v12, %v13
    %v15 = vmul.u32 %v14, 128
    %s16 = sld [smem:[#allocation3]]
    %s17 = smul.u32 %s16, 2654435769
    %v18 = vstv %s17
    %v19 = vadd.s32 %v15, %v18
    %v20 = vlaneseq
    %v21 = vand.u32 %v20, 127
    %v22 = vadd.s32 %v19, %v21
    %v23 = vshrl.u32 %v22, 16
    %v24 = vxor.u32 %v22, %v23
    %v25 = vmul.u32 %v24, 2146121005
    %v26 = vshrl.u32 %v25, 15
    %v27 = vxor.u32 %v25, %v26
    %v28 = vadd.s32 %v27, 2147483648
    %vm30 = vcmp.ge.s32.totalorder %v28, 0
    %v31 = vld [vmem:[%s1] sm:$0x1]
    %v32 = vmul.f32 %v31, 2.0
    %v33 = vsel %vm30, %v32, 0.0
    %34 = vst [vmem:[#allocation4] sm:$0x1] %v33
    // Predicated region
    $region6: #{tpu_custom_call.1} parent=1 // pred_check
      _
    $region7: #{tpu_custom_call.1} parent=1 // pred_check_branch
      %36 = sbr.rel (0) target = $region9
    $region8: #{tpu_custom_call.1} parent=1 // pred_region
      %38 = vsyncadd [#allocation5], 0
      %s40 = sshll.u32 [#allocation4], 4
      %s41 = int_to_ptr.vmem [resolvable:$true] %s40
      %s42 = sshll.u32 %s2, 4
      %s43 = int_to_ptr.hbm [resolvable:$true] %s42
      %45 = dma.vmem_to_hbm [thread:$0]  %s41, 16, %s43, [#allocation5]
    $region9: #{tpu_custom_call.1} parent=1 // pred_fallthru
      _
    // Predicated region
    $region10: #{tpu_custom_call.1} parent=1 // pred_check
      _
    $region11: #{tpu_custom_call.1} parent=1 // pred_check_branch
      %47 = sbr.rel (0) target = $region13
    $region12: #{tpu_custom_call.1} parent=1 // pred_region
      %49 = dma.done [#allocation5], 16
    $region13: #{tpu_custom_call.1} parent=1 // pred_fallthru
      _
    %50 = vsyncpa [#allocation5], 1

</llo_original>
